<compile_context>
chip_gen: v6e
topology: v6e:2x2x1
jax: 0.10.0
libtpu: 0.0.40
codegen_flags: <defaults>
</compile_context>

<pallas_src>
import functools

import jax
import jax.numpy as jnp
from jax.experimental import pallas as pl
from jax.experimental.pallas import tpu as pltpu

K = 3            # kernel_size
STRIDE = 2
PAD = 1
OUT_PAD = 1
EPS = 1e-5       # InstanceNorm2d default eps


def _deconv_in_relu_kernel(x_ref, w_ref, o_ref, *, H, W, NB, compute_dtype):
    # x_ref: (NB, Cin, HWp)    flat input (original dtype), zero padded past H*W
    # w_ref: (4*Cout, 4*Cin)   fused phase/shift weight matrix (compute dtype)
    # o_ref: (NB, 4*Cout, HW)  phase-separated output (store dtype), lane dense
    HW = H * W
    L = NB * HW
    Cout = w_ref.shape[0] // 4

    # Lane mask over the sample-concatenated lane axis: columns at x == W-1 must
    # be zeroed in the +1 / +(W+1) shifted copies (they would wrap into the next
    # row, and -- at a sample boundary -- into the next sample).
    col = jax.lax.broadcasted_iota(jnp.int32, (1, L), 1)
    keep = (col % W) != (W - 1)
    zero = jnp.zeros((), compute_dtype)

    def gather(off):
        # (Cin, NB*HW): the NB samples concatenated on lanes (each HW=H*W slice
        # is 128-aligned).  Cast to the compute dtype here (no wrapper cast op).
        return jnp.concatenate(
            [x_ref[nb, :, pl.ds(off, HW)] for nb in range(NB)], axis=1
        ).astype(compute_dtype)

    # Four shifted copies of the input (sub-pixel phases of the stride-2 deconv).
    s00 = gather(0)
    s01 = jnp.where(keep, gather(1), zero)
    s10 = gather(W)                       # rows past H-1 read the zero pad
    s11 = jnp.where(keep, gather(W + 1), zero)
    s = jnp.concatenate([s00, s01, s10, s11], axis=0)        # (4*Cin, NB*HW)

    # Single fused MXU contraction for all samples and phases, spatial on lanes.
    acc = jnp.dot(w_ref[...], s, preferred_element_type=jnp.float32)  # (4*Cout, L)

    inv_cnt = 1.0 / (4.0 * HW)            # Ho*Wo = 4*H*W output pixels per sample
    for nb in range(NB):                  # NB is small & static (<= 2..4 here)
        a = acc[:, nb * HW:(nb + 1) * HW]                    # static, 128-aligned
        p = [a[i * Cout:(i + 1) * Cout, :] for i in range(4)]

        # Single-pass InstanceNorm2d stats (affine=False): E[x], E[x^2] over the
        # 4 phase row-blocks x the lane axis.  Only 2 cross-lane reductions.
        psum = p[0] + p[1] + p[2] + p[3]
        psq = p[0] * p[0] + p[1] * p[1] + p[2] * p[2] + p[3] * p[3]
        s1 = jnp.sum(psum, axis=1, keepdims=True)            # (Cout, 1)
        s2 = jnp.sum(psq, axis=1, keepdims=True)
        mean = s1 * inv_cnt
        var = jnp.maximum(s2 * inv_cnt - mean * mean, 0.0)
        scale = jax.lax.rsqrt(var + EPS)                     # (Cout, 1)
        shift = mean * scale

        # Direct per-phase stores (aligned (Cout x HW) slabs); no concatenate.
        for ph in range(4):
            o_ref[nb, pl.ds(ph * Cout, Cout), :] = jnp.maximum(
                p[ph] * scale - shift, 0.0).astype(o_ref.dtype)


def _phase_weight(weight):
    """(Cin, Cout, 3, 3) ConvTranspose2d weight -> fused (4*Cout, 4*Cin) matrix.

    Row blocks    = output phases (py, px) in order (0,0),(0,1),(1,0),(1,1).
    Column blocks = input shifts  s00, s01(x+1), s10(y+1), s11(x+1,y+1).
    """
    Cin, Cout = weight.shape[0], weight.shape[1]

    def tap(ky, kx):                                  # (Cout, Cin)
        return jnp.transpose(weight[:, :, ky, kx], (1, 0))

    Z = jnp.zeros((Cout, Cin), weight.dtype)
    rows = [
        [tap(1, 1), Z,         Z,         Z],          # phase (0, 0)
        [tap(1, 2), tap(1, 0), Z,         Z],          # phase (0, 1)
        [tap(2, 1), Z,         tap(0, 1), Z],          # phase (1, 0)
        [tap(2, 2), tap(2, 0), tap(0, 2), tap(0, 0)],  # phase (1, 1)
    ]
    return jnp.block(rows)


def _parallel_tc_count():
    """#TensorCores reachable via a 'parallel' grid axis (v7x / megacore -> 2)."""
    try:
        kind = jax.devices()[0].device_kind.lower()
    except Exception:
        return 1
    return 2 if any(t in kind for t in ("v7", "v4", "v5p")) else 1


def deconv_block(x_nchw, weight, bias=None, *, compute_dtype=jnp.bfloat16):
    """ConvTranspose2d(k=3,s=2,p=1,op=1) + InstanceNorm2d(affine=False) + ReLU.

    NCHW in / NCHW out.  `bias` is accepted for API parity but unused: a
    per-channel constant is cancelled exactly by InstanceNorm's mean
    subtraction (PyTorch InstanceNorm2d default: affine=False, no running
    stats).  Output dtype == compute_dtype.
    """
    del bias
    N, Cin, H, W = x_nchw.shape
    Cout = weight.shape[1]
    Ho, Wo = 2 * H, 2 * W
    HW = H * W
    # Flat spatial, zero-padded so the +W / +(W+1) shifted loads past row H-1
    # read zeros; rounded up to a lane multiple.  x keeps its original dtype
    # (the compute-dtype cast happens in-kernel).
    HWp = ((HW + W + 1 + 127) // 128) * 128
    x_flat = jnp.pad(x_nchw.reshape(N, Cin, HW), ((0, 0), (0, 0), (0, HWp - HW)))
    w_all = _phase_weight(weight.astype(jnp.float32)).astype(compute_dtype)

    out_dtype = compute_dtype
    x_itemsize = jnp.dtype(x_flat.dtype).itemsize
    out_itemsize = jnp.dtype(out_dtype).itemsize

    # Samples per grid step: batch as much as possible into one fused matmul,
    # but leave >= 2 'parallel' steps on dual-TC chips and respect a VMEM budget
    # for the double-buffered input/output blocks.
    min_steps = min(N, _parallel_tc_count())
    NB = max(c for c in range(1, N + 1) if N % c == 0 and N // c >= min_steps)

    def _block_bytes(nb):
        return 2 * (nb * Cin * HWp * x_itemsize + nb * 4 * Cout * HW * out_itemsize)

    vmem_budget = 24 * 1024 * 1024
    while NB > 1 and _block_bytes(NB) > vmem_budget:
        NB = max(c for c in range(1, NB) if N % c == 0)

    kernel = functools.partial(_deconv_in_relu_kernel, H=H, W=W, NB=NB,
                               compute_dtype=compute_dtype)
    cost = pl.CostEstimate(
        flops=2 * N * (4 * Cout) * (4 * Cin) * HW,
        transcendentals=N * Cout,
        bytes_accessed=(x_flat.size * x_itemsize
                        + w_all.size * jnp.dtype(w_all.dtype).itemsize
                        + N * 4 * Cout * HW * out_itemsize),
    )

    out_phase = pl.pallas_call(
        kernel,
        out_shape=jax.ShapeDtypeStruct((N, 4 * Cout, HW), out_dtype),
        grid_spec=pltpu.PrefetchScalarGridSpec(
            num_scalar_prefetch=0,
            grid=(N // NB,),
            in_specs=[
                pl.BlockSpec((NB, Cin, HWp), lambda g: (g, 0, 0)),
                pl.BlockSpec((4 * Cout, 4 * Cin), lambda g: (0, 0)),
            ],
            out_specs=pl.BlockSpec((NB, 4 * Cout, HW), lambda g: (g, 0, 0)),
        ),
        compiler_params=pltpu.CompilerParams(dimension_semantics=("parallel",)),
        cost_estimate=cost,
    )(x_flat, w_all)

    # Depth-to-space (pixel shuffle) of the phase-separated result:
    # (N, [py, px, Cout], H*W) -> (N, Cout, 2H, 2W).  Kept in XLA on the smallest
    # (bf16-halved) operand: an element-level lane interleave has no cheap Mosaic
    # lowering.
    # TODO(synk): fold the px interleave into the kernel store via a bf16-pair ->
    # u32 pack to remove half of this shuffle.
    y = out_phase.reshape(N, 2, 2, Cout, H, W)
    y = jnp.transpose(y, (0, 3, 4, 1, 5, 2))
    return y.reshape(N, Cout, Ho, Wo)


def reference(x_nchw, weight, bias):
    """Pure-JAX reference: conv_transpose via lhs-dilated conv, then IN + ReLU."""
    w_oihw = jnp.transpose(weight[:, :, ::-1, ::-1], (1, 0, 2, 3))   # (Cout,Cin,K,K)
    pad = ((K - 1 - PAD, K - 1 - PAD + OUT_PAD),
           (K - 1 - PAD, K - 1 - PAD + OUT_PAD))
    y = jax.lax.conv_general_dilated(
        x_nchw.astype(jnp.float32), w_oihw.astype(jnp.float32),
        window_strides=(1, 1), padding=pad, lhs_dilation=(STRIDE, STRIDE),
        dimension_numbers=("NCHW", "OIHW", "NCHW"))
    y = y + bias.reshape(1, -1, 1, 1)
    mean = y.mean(axis=(2, 3), keepdims=True)
    var = ((y - mean) ** 2).mean(axis=(2, 3), keepdims=True)
    y = (y - mean) * jax.lax.rsqrt(var + EPS)
    return jnp.maximum(y, 0.0)


if __name__ == "__main__":
    N, Cin, Cout, H, W = 2, 4, 8, 16, 16

    key = jax.random.PRNGKey(0)
    kx, kw, kb = jax.random.split(key, 3)

    x = jax.random.normal(kx, (N, Cin, H, W), jnp.float32)
    # deterministic PyTorch-style uniform init for ConvTranspose2d params
    fan = Cout * K * K
    bound = 1.0 / (fan ** 0.5)
    weight = jax.random.uniform(kw, (Cin, Cout, K, K), jnp.float32, -bound, bound)
    bias = jax.random.uniform(kb, (Cout,), jnp.float32, -bound, bound)

    ref = jax.block_until_ready(reference(x, weight, bias))

    # fp32 compute path: tight check against the fp32 reference.
    out_f32 = jax.block_until_ready(
        deconv_block(x, weight, bias, compute_dtype=jnp.float32))
    assert out_f32.shape == (N, Cout, 2 * H, 2 * W), out_f32.shape
    assert jnp.allclose(out_f32, ref, atol=1e-3, rtol=1e-3), \
        float(jnp.abs(out_f32 - ref).max())

    # Default bf16 path (bf16 matmul inputs + bf16 store, fp32 accumulation/norm):
    # looser tolerance accounts for bf16 input + output quantization.
    out = jax.block_until_ready(deconv_block(x, weight, bias))
    assert out.shape == (N, Cout, 2 * H, 2 * W), out.shape
    assert jnp.allclose(out.astype(jnp.float32), ref, atol=3e-2, rtol=3e-2), \
        float(jnp.abs(out.astype(jnp.float32) - ref).max())

    print("KERNEL_OK")
</pallas_src>

<mosaic_0001>
module attributes {stable_mosaic.version = 11 : i64} {
  func.func @_deconv_in_relu_kernel(%arg0: i32, %arg1: memref<2x4x384xf32, #tpu.memory_space<vmem>>, %arg2: memref<32x16xf32, #tpu.memory_space<vmem>>, %arg3: memref<2x32x256xf32, #tpu.memory_space<vmem>>) attributes {dimension_semantics = [#tpu.dimension_semantics<parallel>], iteration_bounds = array<i64: 1>, scalar_prefetch = 0 : i64, scratch_operands = 0 : i64, tpu.core_type = #tpu.core_type<tc>, window_params = [{transform_indices = @transform_0, window_bounds = array<i64: 2, 4, 384>}, {pipeline_mode = #tpu.pipeline_mode<synchronous>, transform_indices = @transform_1, window_bounds = array<i64: 32, 16>}, {transform_indices = @transform_2, window_bounds = array<i64: 2, 32, 256>}]} {
    %0 = tpu.iota {dimensions = array<i32: 1>} : vector<1x512xi32>
    %c16_i32 = arith.constant 16 : i32
    %c0_i32 = arith.constant 0 : i32
    %1 = arith.cmpi eq, %c16_i32, %c0_i32 : i32
    %c1_i32 = arith.constant 1 : i32
    %2 = arith.select %1, %c1_i32, %c16_i32 : i32
    %3 = vector.broadcast %2 : i32 to vector<1x512xi32>
    %4 = arith.remsi %0, %3 : vector<1x512xi32>
    %c0_i32_0 = arith.constant 0 : i32
    %5 = vector.broadcast %c0_i32_0 : i32 to vector<1x512xi32>
    %6 = arith.cmpi ne, %4, %5 : vector<1x512xi32>
    %c0_i32_1 = arith.constant 0 : i32
    %7 = vector.broadcast %c0_i32_1 : i32 to vector<1x512xi32>
    %8 = arith.cmpi slt, %4, %7 : vector<1x512xi32>
    %c0_i32_2 = arith.constant 0 : i32
    %9 = arith.cmpi slt, %2, %c0_i32_2 : i32
    %10 = vector.broadcast %9 : i1 to vector<1x512xi1>
    %11 = vector.broadcast %10 : vector<1x512xi1> to vector<1x512xi1>
    %12 = arith.xori %8, %11 : vector<1x512xi1>
    %13 = arith.andi %12, %6 : vector<1x512xi1>
    %14 = vector.broadcast %2 : i32 to vector<1x512xi32>
    %15 = arith.addi %4, %14 : vector<1x512xi32>
    %16 = arith.select %13, %15, %4 : vector<1x512xi1>, vector<1x512xi32>
    %c15_i32 = arith.constant 15 : i32
    %17 = vector.broadcast %c15_i32 : i32 to vector<1x512xi32>
    %18 = arith.cmpi ne, %16, %17 : vector<1x512xi32>
    %c0 = arith.constant 0 : index
    %c0_3 = arith.constant 0 : index
    %c0_4 = arith.constant 0 : index
    %19 = vector.load %arg1[%c0, %c0_3, %c0_4] : memref<2x4x384xf32, #tpu.memory_space<vmem>>, vector<1x4x256xf32>
    %20 = vector.shape_cast %19 : vector<1x4x256xf32> to vector<4x256xf32>
    %c1 = arith.constant 1 : index
    %c0_5 = arith.constant 0 : index
    %c0_6 = arith.constant 0 : index
    %21 = vector.load %arg1[%c1, %c0_5, %c0_6] : memref<2x4x384xf32, #tpu.memory_space<vmem>>, vector<1x4x256xf32>
    %22 = vector.shape_cast %21 : vector<1x4x256xf32> to vector<4x256xf32>
    %23 = tpu.concatenate %20, %22 in 1 : vector<4x256xf32>, vector<4x256xf32> -> vector<4x512xf32>
    %c0_7 = arith.constant 0 : index
    %c0_8 = arith.constant 0 : index
    %c1_9 = arith.constant 1 : index
    %24 = vector.load %arg1[%c0_7, %c0_8, %c1_9] : memref<2x4x384xf32, #tpu.memory_space<vmem>>, vector<1x4x256xf32>
    %25 = vector.shape_cast %24 : vector<1x4x256xf32> to vector<4x256xf32>
    %c1_10 = arith.constant 1 : index
    %c0_11 = arith.constant 0 : index
    %c1_12 = arith.constant 1 : index
    %26 = vector.load %arg1[%c1_10, %c0_11, %c1_12] : memref<2x4x384xf32, #tpu.memory_space<vmem>>, vector<1x4x256xf32>
    %27 = vector.shape_cast %26 : vector<1x4x256xf32> to vector<4x256xf32>
    %28 = tpu.concatenate %25, %27 in 1 : vector<4x256xf32>, vector<4x256xf32> -> vector<4x512xf32>
    %cst = arith.constant 0.000000e+00 : f32
    %29 = vector.shape_cast %18 : vector<1x512xi1> to vector<1x512xi1>
    %30 = vector.broadcast %29 : vector<1x512xi1> to vector<4x512xi1>
    %31 = vector.broadcast %cst : f32 to vector<4x512xf32>
    %32 = arith.select %30, %28, %31 : vector<4x512xi1>, vector<4x512xf32>
    %c0_13 = arith.constant 0 : index
    %c0_14 = arith.constant 0 : index
    %c16 = arith.constant 16 : index
    %33 = vector.load %arg1[%c0_13, %c0_14, %c16] : memref<2x4x384xf32, #tpu.memory_space<vmem>>, vector<1x4x256xf32>
    %34 = vector.shape_cast %33 : vector<1x4x256xf32> to vector<4x256xf32>
    %c1_15 = arith.constant 1 : index
    %c0_16 = arith.constant 0 : index
    %c16_17 = arith.constant 16 : index
    %35 = vector.load %arg1[%c1_15, %c0_16, %c16_17] : memref<2x4x384xf32, #tpu.memory_space<vmem>>, vector<1x4x256xf32>
    %36 = vector.shape_cast %35 : vector<1x4x256xf32> to vector<4x256xf32>
    %37 = tpu.concatenate %34, %36 in 1 : vector<4x256xf32>, vector<4x256xf32> -> vector<4x512xf32>
    %c0_18 = arith.constant 0 : index
    %c0_19 = arith.constant 0 : index
    %c17 = arith.constant 17 : index
    %38 = vector.load %arg1[%c0_18, %c0_19, %c17] : memref<2x4x384xf32, #tpu.memory_space<vmem>>, vector<1x4x256xf32>
    %39 = vector.shape_cast %38 : vector<1x4x256xf32> to vector<4x256xf32>
    %c1_20 = arith.constant 1 : index
    %c0_21 = arith.constant 0 : index
    %c17_22 = arith.constant 17 : index
    %40 = vector.load %arg1[%c1_20, %c0_21, %c17_22] : memref<2x4x384xf32, #tpu.memory_space<vmem>>, vector<1x4x256xf32>
    %41 = vector.shape_cast %40 : vector<1x4x256xf32> to vector<4x256xf32>
    %42 = tpu.concatenate %39, %41 in 1 : vector<4x256xf32>, vector<4x256xf32> -> vector<4x512xf32>
    %cst_23 = arith.constant 0.000000e+00 : f32
    %43 = vector.shape_cast %18 : vector<1x512xi1> to vector<1x512xi1>
    %44 = vector.broadcast %43 : vector<1x512xi1> to vector<4x512xi1>
    %45 = vector.broadcast %cst_23 : f32 to vector<4x512xf32>
    %46 = arith.select %44, %42, %45 : vector<4x512xi1>, vector<4x512xf32>
    %47 = tpu.concatenate %23, %32, %37, %46 in 0 : vector<4x512xf32>, vector<4x512xf32>, vector<4x512xf32>, vector<4x512xf32> -> vector<16x512xf32>
    %c0_24 = arith.constant 0 : index
    %c0_25 = arith.constant 0 : index
    %48 = vector.load %arg2[%c0_24, %c0_25] : memref<32x16xf32, #tpu.memory_space<vmem>>, vector<32x16xf32>
    %cst_26 = arith.constant dense<0.000000e+00> : vector<32x512xf32>
    %49 = tpu.matmul %48, %47, %cst_26 {dimension_numbers = #tpu.dot_dimension_numbers<[1], [0], [0], [1], [0, 0, 1, 1], [], []>} : vector<32x16xf32>, vector<16x512xf32>, vector<32x512xf32> -> vector<32x512xf32>
    %50 = vector.extract_strided_slice %49 {offsets = [0, 0], sizes = [32, 256], strides = [1, 1]} : vector<32x512xf32> to vector<32x256xf32>
    %51 = vector.extract_strided_slice %50 {offsets = [0, 0], sizes = [8, 256], strides = [1, 1]} : vector<32x256xf32> to vector<8x256xf32>
    %52 = vector.extract_strided_slice %50 {offsets = [8, 0], sizes = [8, 256], strides = [1, 1]} : vector<32x256xf32> to vector<8x256xf32>
    %53 = vector.extract_strided_slice %50 {offsets = [16, 0], sizes = [8, 256], strides = [1, 1]} : vector<32x256xf32> to vector<8x256xf32>
    %54 = vector.extract_strided_slice %50 {offsets = [24, 0], sizes = [8, 256], strides = [1, 1]} : vector<32x256xf32> to vector<8x256xf32>
    %55 = arith.addf %51, %52 : vector<8x256xf32>
    %56 = arith.addf %55, %53 : vector<8x256xf32>
    %57 = arith.addf %56, %54 : vector<8x256xf32>
    %58 = arith.mulf %51, %51 : vector<8x256xf32>
    %59 = arith.mulf %52, %52 : vector<8x256xf32>
    %60 = arith.addf %58, %59 : vector<8x256xf32>
    %61 = arith.mulf %53, %53 : vector<8x256xf32>
    %62 = arith.addf %60, %61 : vector<8x256xf32>
    %63 = arith.mulf %54, %54 : vector<8x256xf32>
    %64 = arith.addf %62, %63 : vector<8x256xf32>
    %cst_27 = arith.constant dense<0.000000e+00> : vector<8xf32>
    %65 = vector.multi_reduction <add>, %57, %cst_27 [1] : vector<8x256xf32> to vector<8xf32>
    %66 = vector.shape_cast %65 : vector<8xf32> to vector<8x1xf32>
    %cst_28 = arith.constant dense<0.000000e+00> : vector<8xf32>
    %67 = vector.multi_reduction <add>, %64, %cst_28 [1] : vector<8x256xf32> to vector<8xf32>
    %68 = vector.shape_cast %67 : vector<8xf32> to vector<8x1xf32>
    %cst_29 = arith.constant 9.765625E-4 : f32
    %69 = vector.broadcast %cst_29 : f32 to vector<8x1xf32>
    %70 = arith.mulf %66, %69 : vector<8x1xf32>
    %cst_30 = arith.constant 9.765625E-4 : f32
    %71 = vector.broadcast %cst_30 : f32 to vector<8x1xf32>
    %72 = arith.mulf %68, %71 : vector<8x1xf32>
    %73 = arith.mulf %70, %70 : vector<8x1xf32>
    %74 = arith.subf %72, %73 : vector<8x1xf32>
    %cst_31 = arith.constant 0.000000e+00 : f32
    %75 = vector.broadcast %cst_31 : f32 to vector<8x1xf32>
    %76 = arith.maximumf %74, %75 : vector<8x1xf32>
    %cst_32 = arith.constant 9.99999974E-6 : f32
    %77 = vector.broadcast %cst_32 : f32 to vector<8x1xf32>
    %78 = arith.addf %76, %77 : vector<8x1xf32>
    %79 = math.rsqrt %78 : vector<8x1xf32>
    %80 = arith.mulf %70, %79 : vector<8x1xf32>
    %81 = vector.broadcast %79 : vector<8x1xf32> to vector<8x256xf32>
    %82 = arith.mulf %51, %81 : vector<8x256xf32>
    %83 = vector.broadcast %80 : vector<8x1xf32> to vector<8x256xf32>
    %84 = arith.subf %82, %83 : vector<8x256xf32>
    %cst_33 = arith.constant 0.000000e+00 : f32
    %85 = vector.broadcast %cst_33 : f32 to vector<8x256xf32>
    %86 = arith.maximumf %84, %85 : vector<8x256xf32>
    %c0_34 = arith.constant 0 : index
    %c0_35 = arith.constant 0 : index
    %c0_36 = arith.constant 0 : index
    %87 = vector.load %arg3[%c0_34, %c0_35, %c0_36] : memref<2x32x256xf32, #tpu.memory_space<vmem>>, vector<1x8x256xf32>
    %88 = vector.shape_cast %87 : vector<1x8x256xf32> to vector<8x256xf32>
    %89 = vector.shape_cast %86 : vector<8x256xf32> to vector<1x8x256xf32>
    tpu.vector_store %arg3[%c0_34, %c0_35, %c0_36], %89 {strides = array<i32>} : memref<2x32x256xf32, #tpu.memory_space<vmem>>, vector<1x8x256xf32>,
    %90 = vector.broadcast %79 : vector<8x1xf32> to vector<8x256xf32>
    %91 = arith.mulf %52, %90 : vector<8x256xf32>
    %92 = vector.broadcast %80 : vector<8x1xf32> to vector<8x256xf32>
    %93 = arith.subf %91, %92 : vector<8x256xf32>
    %cst_37 = arith.constant 0.000000e+00 : f32
    %94 = vector.broadcast %cst_37 : f32 to vector<8x256xf32>
    %95 = arith.maximumf %93, %94 : vector<8x256xf32>
    %c0_38 = arith.constant 0 : index
    %c8 = arith.constant 8 : index
    %c0_39 = arith.constant 0 : index
    %96 = vector.load %arg3[%c0_38, %c8, %c0_39] : memref<2x32x256xf32, #tpu.memory_space<vmem>>, vector<1x8x256xf32>
    %97 = vector.shape_cast %96 : vector<1x8x256xf32> to vector<8x256xf32>
    %98 = vector.shape_cast %95 : vector<8x256xf32> to vector<1x8x256xf32>
    tpu.vector_store %arg3[%c0_38, %c8, %c0_39], %98 {strides = array<i32>} : memref<2x32x256xf32, #tpu.memory_space<vmem>>, vector<1x8x256xf32>,
    %99 = vector.broadcast %79 : vector<8x1xf32> to vector<8x256xf32>
    %100 = arith.mulf %53, %99 : vector<8x256xf32>
    %101 = vector.broadcast %80 : vector<8x1xf32> to vector<8x256xf32>
    %102 = arith.subf %100, %101 : vector<8x256xf32>
    %cst_40 = arith.constant 0.000000e+00 : f32
    %103 = vector.broadcast %cst_40 : f32 to vector<8x256xf32>
    %104 = arith.maximumf %102, %103 : vector<8x256xf32>
    %c0_41 = arith.constant 0 : index
    %c16_42 = arith.constant 16 : index
    %c0_43 = arith.constant 0 : index
    %105 = vector.load %arg3[%c0_41, %c16_42, %c0_43] : memref<2x32x256xf32, #tpu.memory_space<vmem>>, vector<1x8x256xf32>
    %106 = vector.shape_cast %105 : vector<1x8x256xf32> to vector<8x256xf32>
    %107 = vector.shape_cast %104 : vector<8x256xf32> to vector<1x8x256xf32>
    tpu.vector_store %arg3[%c0_41, %c16_42, %c0_43], %107 {strides = array<i32>} : memref<2x32x256xf32, #tpu.memory_space<vmem>>, vector<1x8x256xf32>,
    %108 = vector.broadcast %79 : vector<8x1xf32> to vector<8x256xf32>
    %109 = arith.mulf %54, %108 : vector<8x256xf32>
    %110 = vector.broadcast %80 : vector<8x1xf32> to vector<8x256xf32>
    %111 = arith.subf %109, %110 : vector<8x256xf32>
    %cst_44 = arith.constant 0.000000e+00 : f32
    %112 = vector.broadcast %cst_44 : f32 to vector<8x256xf32>
    %113 = arith.maximumf %111, %112 : vector<8x256xf32>
    %c0_45 = arith.constant 0 : index
    %c24 = arith.constant 24 : index
    %c0_46 = arith.constant 0 : index
    %114 = vector.load %arg3[%c0_45, %c24, %c0_46] : memref<2x32x256xf32, #tpu.memory_space<vmem>>, vector<1x8x256xf32>
    %115 = vector.shape_cast %114 : vector<1x8x256xf32> to vector<8x256xf32>
    %116 = vector.shape_cast %113 : vector<8x256xf32> to vector<1x8x256xf32>
    tpu.vector_store %arg3[%c0_45, %c24, %c0_46], %116 {strides = array<i32>} : memref<2x32x256xf32, #tpu.memory_space<vmem>>, vector<1x8x256xf32>,
    %117 = vector.extract_strided_slice %49 {offsets = [0, 256], sizes = [32, 256], strides = [1, 1]} : vector<32x512xf32> to vector<32x256xf32>
    %118 = vector.extract_strided_slice %117 {offsets = [0, 0], sizes = [8, 256], strides = [1, 1]} : vector<32x256xf32> to vector<8x256xf32>
    %119 = vector.extract_strided_slice %117 {offsets = [8, 0], sizes = [8, 256], strides = [1, 1]} : vector<32x256xf32> to vector<8x256xf32>
    %120 = vector.extract_strided_slice %117 {offsets = [16, 0], sizes = [8, 256], strides = [1, 1]} : vector<32x256xf32> to vector<8x256xf32>
    %121 = vector.extract_strided_slice %117 {offsets = [24, 0], sizes = [8, 256], strides = [1, 1]} : vector<32x256xf32> to vector<8x256xf32>
    %122 = arith.addf %118, %119 : vector<8x256xf32>
    %123 = arith.addf %122, %120 : vector<8x256xf32>
    %124 = arith.addf %123, %121 : vector<8x256xf32>
    %125 = arith.mulf %118, %118 : vector<8x256xf32>
    %126 = arith.mulf %119, %119 : vector<8x256xf32>
    %127 = arith.addf %125, %126 : vector<8x256xf32>
    %128 = arith.mulf %120, %120 : vector<8x256xf32>
    %129 = arith.addf %127, %128 : vector<8x256xf32>
    %130 = arith.mulf %121, %121 : vector<8x256xf32>
    %131 = arith.addf %129, %130 : vector<8x256xf32>
    %cst_47 = arith.constant dense<0.000000e+00> : vector<8xf32>
    %132 = vector.multi_reduction <add>, %124, %cst_47 [1] : vector<8x256xf32> to vector<8xf32>
    %133 = vector.shape_cast %132 : vector<8xf32> to vector<8x1xf32>
    %cst_48 = arith.constant dense<0.000000e+00> : vector<8xf32>
    %134 = vector.multi_reduction <add>, %131, %cst_48 [1] : vector<8x256xf32> to vector<8xf32>
    %135 = vector.shape_cast %134 : vector<8xf32> to vector<8x1xf32>
    %cst_49 = arith.constant 9.765625E-4 : f32
    %136 = vector.broadcast %cst_49 : f32 to vector<8x1xf32>
    %137 = arith.mulf %133, %136 : vector<8x1xf32>
    %cst_50 = arith.constant 9.765625E-4 : f32
    %138 = vector.broadcast %cst_50 : f32 to vector<8x1xf32>
    %139 = arith.mulf %135, %138 : vector<8x1xf32>
    %140 = arith.mulf %137, %137 : vector<8x1xf32>
    %141 = arith.subf %139, %140 : vector<8x1xf32>
    %cst_51 = arith.constant 0.000000e+00 : f32
    %142 = vector.broadcast %cst_51 : f32 to vector<8x1xf32>
    %143 = arith.maximumf %141, %142 : vector<8x1xf32>
    %cst_52 = arith.constant 9.99999974E-6 : f32
    %144 = vector.broadcast %cst_52 : f32 to vector<8x1xf32>
    %145 = arith.addf %143, %144 : vector<8x1xf32>
    %146 = math.rsqrt %145 : vector<8x1xf32>
    %147 = arith.mulf %137, %146 : vector<8x1xf32>
    %148 = vector.broadcast %146 : vector<8x1xf32> to vector<8x256xf32>
    %149 = arith.mulf %118, %148 : vector<8x256xf32>
    %150 = vector.broadcast %147 : vector<8x1xf32> to vector<8x256xf32>
    %151 = arith.subf %149, %150 : vector<8x256xf32>
    %cst_53 = arith.constant 0.000000e+00 : f32
    %152 = vector.broadcast %cst_53 : f32 to vector<8x256xf32>
    %153 = arith.maximumf %151, %152 : vector<8x256xf32>
    %c1_54 = arith.constant 1 : index
    %c0_55 = arith.constant 0 : index
    %c0_56 = arith.constant 0 : index
    %154 = vector.load %arg3[%c1_54, %c0_55, %c0_56] : memref<2x32x256xf32, #tpu.memory_space<vmem>>, vector<1x8x256xf32>
    %155 = vector.shape_cast %154 : vector<1x8x256xf32> to vector<8x256xf32>
    %156 = vector.shape_cast %153 : vector<8x256xf32> to vector<1x8x256xf32>
    tpu.vector_store %arg3[%c1_54, %c0_55, %c0_56], %156 {strides = array<i32>} : memref<2x32x256xf32, #tpu.memory_space<vmem>>, vector<1x8x256xf32>,
    %157 = vector.broadcast %146 : vector<8x1xf32> to vector<8x256xf32>
    %158 = arith.mulf %119, %157 : vector<8x256xf32>
    %159 = vector.broadcast %147 : vector<8x1xf32> to vector<8x256xf32>
    %160 = arith.subf %158, %159 : vector<8x256xf32>
    %cst_57 = arith.constant 0.000000e+00 : f32
    %161 = vector.broadcast %cst_57 : f32 to vector<8x256xf32>
    %162 = arith.maximumf %160, %161 : vector<8x256xf32>
    %c1_58 = arith.constant 1 : index
    %c8_59 = arith.constant 8 : index
    %c0_60 = arith.constant 0 : index
    %163 = vector.load %arg3[%c1_58, %c8_59, %c0_60] : memref<2x32x256xf32, #tpu.memory_space<vmem>>, vector<1x8x256xf32>
    %164 = vector.shape_cast %163 : vector<1x8x256xf32> to vector<8x256xf32>
    %165 = vector.shape_cast %162 : vector<8x256xf32> to vector<1x8x256xf32>
    tpu.vector_store %arg3[%c1_58, %c8_59, %c0_60], %165 {strides = array<i32>} : memref<2x32x256xf32, #tpu.memory_space<vmem>>, vector<1x8x256xf32>,
    %166 = vector.broadcast %146 : vector<8x1xf32> to vector<8x256xf32>
    %167 = arith.mulf %120, %166 : vector<8x256xf32>
    %168 = vector.broadcast %147 : vector<8x1xf32> to vector<8x256xf32>
    %169 = arith.subf %167, %168 : vector<8x256xf32>
    %cst_61 = arith.constant 0.000000e+00 : f32
    %170 = vector.broadcast %cst_61 : f32 to vector<8x256xf32>
    %171 = arith.maximumf %169, %170 : vector<8x256xf32>
    %c1_62 = arith.constant 1 : index
    %c16_63 = arith.constant 16 : index
    %c0_64 = arith.constant 0 : index
    %172 = vector.load %arg3[%c1_62, %c16_63, %c0_64] : memref<2x32x256xf32, #tpu.memory_space<vmem>>, vector<1x8x256xf32>
    %173 = vector.shape_cast %172 : vector<1x8x256xf32> to vector<8x256xf32>
    %174 = vector.shape_cast %171 : vector<8x256xf32> to vector<1x8x256xf32>
    tpu.vector_store %arg3[%c1_62, %c16_63, %c0_64], %174 {strides = array<i32>} : memref<2x32x256xf32, #tpu.memory_space<vmem>>, vector<1x8x256xf32>,
    %175 = vector.broadcast %146 : vector<8x1xf32> to vector<8x256xf32>
    %176 = arith.mulf %121, %175 : vector<8x256xf32>
    %177 = vector.broadcast %147 : vector<8x1xf32> to vector<8x256xf32>
    %178 = arith.subf %176, %177 : vector<8x256xf32>
    %cst_65 = arith.constant 0.000000e+00 : f32
    %179 = vector.broadcast %cst_65 : f32 to vector<8x256xf32>
    %180 = arith.maximumf %178, %179 : vector<8x256xf32>
    %c1_66 = arith.constant 1 : index
    %c24_67 = arith.constant 24 : index
    %c0_68 = arith.constant 0 : index
    %181 = vector.load %arg3[%c1_66, %c24_67, %c0_68] : memref<2x32x256xf32, #tpu.memory_space<vmem>>, vector<1x8x256xf32>
    %182 = vector.shape_cast %181 : vector<1x8x256xf32> to vector<8x256xf32>
    %183 = vector.shape_cast %180 : vector<8x256xf32> to vector<1x8x256xf32>
    tpu.vector_store %arg3[%c1_66, %c24_67, %c0_68], %183 {strides = array<i32>} : memref<2x32x256xf32, #tpu.memory_space<vmem>>, vector<1x8x256xf32>,
    return
  }
  func.func @transform_0(%arg0: i32) -> (i32, i32, i32) {
    %c0_i32 = arith.constant 0 : i32
    %c0_i32_0 = arith.constant 0 : i32
    %c0_i32_1 = arith.constant 0 : i32
    return %arg0, %c0_i32, %c0_i32_0 : i32, i32, i32
  }
  func.func @transform_1(%arg0: i32) -> (i32, i32) {
    %c0_i32 = arith.constant 0 : i32
    %c0_i32_0 = arith.constant 0 : i32
    %c0_i32_1 = arith.constant 0 : i32
    return %c0_i32, %c0_i32_0 : i32, i32
  }
  func.func @transform_2(%arg0: i32) -> (i32, i32, i32) {
    %c0_i32 = arith.constant 0 : i32
    %c0_i32_0 = arith.constant 0 : i32
    %c0_i32_1 = arith.constant 0 : i32
    return %arg0, %c0_i32, %c0_i32_0 : i32, i32, i32
  }
}

</mosaic_0001>

<llo_original>
// kernel: tpu_custom_call.1
$region0: #{tpu_custom_call.1}
  #allocation0 [shape = 'u32[]', space=smem, size = 0x4, offset = 0x4, fixed_abs, tag = 'smem constant byte address 0x4 - core index']
  #allocation1 [shape = 'u32[144,128]{1,0:T(1,128)}', space=vmem, size = 0x12000, scoped, tag = 'internal scratch']
  %s0 = inlined_call_operand.vmem [shape: f32[2,4,384], index: 0, kind: input, shape index: {}]
  %s1 = inlined_call_operand.vmem [shape: f32[32,16], index: 1, kind: input, shape index: {}]
  %s2 = inlined_call_operand.hbm [shape: f32[2,32,256], index: 2, kind: output, shape index: {}]
  %s3 = sld [smem:[#allocation0]]
  $region18: #{tpu_custom_call.1} parent=0
    _
  %s5 = ssub.s32 1, %s3
  %s6 = scalar_select 0, %s5, %s3
  $region1: #{tpu_custom_call.1} parent=0
    #allocation2 [shape = 'u8[65536]{0}', space=vmem, size = 0x10000, scoped, tag = 'output window, operand 0, single buffered']
    #allocation3 [shape = 's32[1]{0}', space=sflag, size = 0x4, scoped, tag = 'scoped memory for tpu_custom_call.1']
    %7 = vsyncpa [#allocation3], 0
    // Predicated region
    $region2: #{tpu_custom_call.1} parent=1 // pred_check
      _
    $region3: #{tpu_custom_call.1} parent=1 // pred_check_branch
      %9 = sbr.rel (0) target = $region5
    $region4: #{tpu_custom_call.1} parent=1 // pred_region
      _
    $region5: #{tpu_custom_call.1} parent=1 // pred_fallthru
      _
    // Predicated region
    $region6: #{tpu_custom_call.1} parent=1 // pred_check
      _
    $region7: #{tpu_custom_call.1} parent=1 // pred_check_branch
      %11 = sbr.rel (0) target = $region9
    $region8: #{tpu_custom_call.1} parent=1 // pred_region
      _
    $region9: #{tpu_custom_call.1} parent=1 // pred_fallthru
      _
    %v12 = vlaneseq
    %v13 = vand.u32 %v12, 127
    %v14 = vadd.s32 %v13, 128
    %v15 = vadd.s32 %v13, 256
    %v16 = vadd.s32 %v13, 384
    %vm17 = vcmp.lt.s32.totalorder %v13, 0
    %v18 = vsub.s32 0, %v13
    %v19 = vsel %vm17, %v18, %v13
    %v20 = vshrl.u32 %v19, 4
    %v21 = vand.u32 %v19, 15
    %v22 = vsub.s32 0, %v21
    %v23 = vsel %vm17, %v22, %v21
    %vm24 = vcmp.lt.s32.totalorder %v14, 0
    %v25 = vsub.s32 0, %v14
    %v26 = vsel %vm24, %v25, %v14
    %v27 = vshrl.u32 %v26, 4
    %v28 = vand.u32 %v26, 15
    %v29 = vsub.s32 0, %v28
    %v30 = vsel %vm24, %v29, %v28
    %vm31 = vcmp.lt.s32.totalorder %v15, 0
    %v32 = vsub.s32 0, %v15
    %v33 = vsel %vm31, %v32, %v15
    %v34 = vshrl.u32 %v33, 4
    %v35 = vand.u32 %v33, 15
    %v36 = vsub.s32 0, %v35
    %v37 = vsel %vm31, %v36, %v35
    %vm38 = vcmp.lt.s32.totalorder %v16, 0
    %v39 = vsub.s32 0, %v16
    %v40 = vsel %vm38, %v39, %v16
    %v41 = vshrl.u32 %v40, 4
    %v42 = vand.u32 %v40, 15
    %v43 = vsub.s32 0, %v42
    %v44 = vsel %vm38, %v43, %v42
    %vm45 = vcmp.ne.s32.totalorder %v23, 0
    %vm46 = vcmp.ne.s32.totalorder %v30, 0
    %vm47 = vcmp.ne.s32.totalorder %v37, 0
    %vm48 = vcmp.ne.s32.totalorder %v44, 0
    %vm49 = vcmp.lt.s32.totalorder %v23, 0
    %vm50 = vcmp.lt.s32.totalorder %v30, 0
    %vm51 = vcmp.lt.s32.totalorder %v37, 0
    %vm52 = vcmp.lt.s32.totalorder %v44, 0
    %vm53 = vmand %vm49, %vm45
    %vm54 = vmand %vm50, %vm46
    %vm55 = vmand %vm51, %vm47
    %vm56 = vmand %vm52, %vm48
    %v57 = vadd.s32 %v23, 16
    %v58 = vadd.s32 %v30, 16
    %v59 = vadd.s32 %v37, 16
    %v60 = vadd.s32 %v44, 16
    %v61 = vsel %vm53, %v57, %v23
    %v62 = vsel %vm54, %v58, %v30
    %v63 = vsel %vm55, %v59, %v37
    %v64 = vsel %vm56, %v60, %v44
    %vm65 = vcmp.ne.s32.totalorder %v61, 15
    %vm66 = vcmp.ne.s32.totalorder %v62, 15
    %vm67 = vcmp.ne.s32.totalorder %v63, 15
    %vm68 = vcmp.ne.s32.totalorder %v64, 15
    %v69 = vld [vmem:[%s0] sm:$0xff]
    %s70 = scalar_lea.vmem %s0, 12
    %v71 = vld [vmem:[%s70] sm:$0xff]
    %v73 = vcombine.high %v69, %v69
    %v76 = vcombine.high %v71, %v71
    %v78 = vld [vmem:[%s0 + $0x8] sm:$0xf]
    %v79 = vld [vmem:[%s70 + $0x8] sm:$0xf]
    %81 = vrot.lane.b32.xlu0 %v69, 127
    %v82 = vpop.permute.xlu0 %81
    %83 = vrot.lane.b32.xlu0 %v73, 127
    %v84 = vpop.permute.xlu0 %83
    %85 = vrot.lane.b32.xlu0 %v78, 127
    %v86 = vpop.permute.xlu0 %85
    %vm87 = vcmask 1039360
    %v88 = vsel %vm87, %v82, %v84
    %v89 = vsel %vm87, %v84, %v86
    %93 = vrot.lane.b32.xlu0 %v71, 127
    %v94 = vpop.permute.xlu0 %93
    %95 = vrot.lane.b32.xlu0 %v76, 127
    %v96 = vpop.permute.xlu0 %95
    %97 = vrot.lane.b32.xlu0 %v79, 127
    %v98 = vpop.permute.xlu0 %97
    %v99 = vsel %vm87, %v94, %v96
    %v100 = vsel %vm87, %v96, %v98
    %v103 = vsel %vm65, 1, 0
    %v104 = vsel %vm66, 1, 0
    %v105 = vsel %vm67, 1, 0
    %v106 = vsel %vm68, 1, 0
    %vm107 = vcmp.eq.s32.totalorder %v103, 1
    %vm108 = vcmp.eq.s32.totalorder %v104, 1
    %vm109 = vcmp.eq.s32.totalorder %v105, 1
    %vm110 = vcmp.eq.s32.totalorder %v106, 1
    %v111 = vsel %vm107, %v88, 0.0
    %v112 = vsel %vm108, %v89, 0.0
    %v113 = vsel %vm109, %v99, 0.0
    %v114 = vsel %vm110, %v100, 0.0
    %115 = vrot.lane.b32.xlu0 %v69, 112
    %v116 = vpop.permute.xlu0 %115
    %117 = vrot.lane.b32.xlu0 %v73, 112
    %v118 = vpop.permute.xlu0 %117
    %119 = vrot.lane.b32.xlu0 %v78, 112
    %v120 = vpop.permute.xlu0 %119
    %vm121 = vcmask 916480
    %v122 = vsel %vm121, %v116, %v118
    %v123 = vsel %vm121, %v118, %v120
    %126 = vrot.lane.b32.xlu0 %v71, 112
    %v127 = vpop.permute.xlu0 %126
    %128 = vrot.lane.b32.xlu0 %v76, 112
    %v129 = vpop.permute.xlu0 %128
    %130 = vrot.lane.b32.xlu0 %v79, 112
    %v131 = vpop.permute.xlu0 %130
    %v132 = vsel %vm121, %v127, %v129
    %v133 = vsel %vm121, %v129, %v131
    %136 = vrot.lane.b32.xlu0 %v69, 111
    %v137 = vpop.permute.xlu0 %136
    %138 = vrot.lane.b32.xlu0 %v73, 111
    %v139 = vpop.permute.xlu0 %138
    %140 = vrot.lane.b32.xlu0 %v78, 111
    %v141 = vpop.permute.xlu0 %140
    %vm142 = vcmask 908288
    %v143 = vsel %vm142, %v137, %v139
    %v144 = vsel %vm142, %v139, %v141
    %147 = vrot.lane.b32.xlu0 %v71, 111
    %v148 = vpop.permute.xlu0 %147
    %149 = vrot.lane.b32.xlu0 %v76, 111
    %v150 = vpop.permute.xlu0 %149
    %151 = vrot.lane.b32.xlu0 %v79, 111
    %v152 = vpop.permute.xlu0 %151
    %v153 = vsel %vm142, %v148, %v150
    %v154 = vsel %vm142, %v150, %v152
    %v157 = vsel %vm107, %v143, 0.0
    %v158 = vsel %vm108, %v144, 0.0
    %v159 = vsel %vm109, %v153, 0.0
    %v160 = vsel %vm110, %v154, 0.0
    %v165 = vrot.slane %v111, 4
    %v166 = vrot.slane %v112, 4
    %v167 = vrot.slane %v113, 4
    %v168 = vrot.slane %v114, 4
    %v177 = vrot.slane %v157, 4
    %v178 = vrot.slane %v158, 4
    %v179 = vrot.slane %v159, 4
    %v180 = vrot.slane %v160, 4
    %vm185 = vcmask 1043456
    %v186 = vsel %vm185, %v69, %v165
    %v187 = vsel %vm185, %v73, %v166
    %v188 = vsel %vm185, %v71, %v167
    %v189 = vsel %vm185, %v76, %v168
    %v190 = vsel %vm185, %v122, %v177
    %v191 = vsel %vm185, %v123, %v178
    %v192 = vsel %vm185, %v132, %v179
    %v193 = vsel %vm185, %v133, %v180
    %v194 = vld [vmem:[%s1] sm:$0xff]
    %v195 = vld [vmem:[%s1 + $0x8] sm:$0xff]
    %v196 = vld [vmem:[%s1 + $0x10] sm:$0xff]
    %v197 = vld [vmem:[%s1 + $0x18] sm:$0xff]
    %vm198 = vcmask 130048
    %v200 = vsel %vm198, %v194, 0
    %v203 = vsel %vm198, %v195, 0
    %v206 = vsel %vm198, %v196, 0
    %v209 = vsel %vm198, %v197, 0
    %211 = vmatprep.subr.mxu0 0.0
    %212 = vmatpush1.msra.mxu0 0.0
    %213 = vmatprep.subr.mxu0 0.0
    %214 = vmatpush1.msra.mxu0 0.0
    %215 = vmatprep.subr.mxu0 0.0
    %216 = vmatpush1.msra.mxu0 0.0
    %217 = vmatprep.subr.mxu0 0.0
    %218 = vmatpush1.msra.mxu0 0.0
    %219 = vmatprep.subr.mxu0 0.0
    %220 = vmatpush1.msra.mxu0 0.0
    %221 = vmatprep.subr.mxu0 0.0
    %222 = vmatpush1.msra.mxu0 0.0
    %223 = vmatprep.subr.mxu0 0.0
    %224 = vmatpush1.msra.mxu0 0.0
    %225 = vmatprep.subr.mxu0 0.0
    %226 = vmatpush1.msra.mxu0 0.0
    %227 = vmatprep.subr.mxu0 0.0
    %228 = vmatpush1.msra.mxu0 0.0
    %229 = vmatprep.subr.mxu0 0.0
    %230 = vmatpush1.msra.mxu0 0.0
    %231 = vmatprep.subr.mxu0 0.0
    %232 = vmatpush1.msra.mxu0 0.0
    %233 = vmatprep.subr.mxu0 0.0
    %234 = vmatpush1.msra.mxu0 0.0
    %235 = vmatprep.subr.mxu0 0.0
    %236 = vmatpush1.msra.mxu0 0.0
    %237 = vmatprep.subr.mxu0 0.0
    %238 = vmatpush1.msra.mxu0 0.0
    %239 = vmatprep.subr.mxu0 %v191
    %240 = vmatpush1.msra.mxu0 %v190
    %241 = vmatprep.subr.mxu0 %v187
    %242 = vmatpush1.msra.mxu0 %v186
    %243 = vmatprep.subr.mxu0 0.0
    %244 = vmatpush2.msra.mxu0 0.0
    %245 = vmatprep.subr.mxu0 0.0
    %246 = vmatpush2.msra.mxu0 0.0
    %247 = vmatprep.subr.mxu0 0.0
    %248 = vmatpush2.msra.mxu0 0.0
    %249 = vmatprep.subr.mxu0 0.0
    %250 = vmatpush2.msra.mxu0 0.0
    %251 = vmatprep.subr.mxu0 0.0
    %252 = vmatpush2.msra.mxu0 0.0
    %253 = vmatprep.subr.mxu0 0.0
    %254 = vmatpush2.msra.mxu0 0.0
    %255 = vmatprep.subr.mxu0 0.0
    %256 = vmatpush2.msra.mxu0 0.0
    %257 = vmatprep.subr.mxu0 0.0
    %258 = vmatpush2.msra.mxu0 0.0
    %259 = vmatprep.subr.mxu0 0.0
    %260 = vmatpush2.msra.mxu0 0.0
    %261 = vmatprep.subr.mxu0 0.0
    %262 = vmatpush2.msra.mxu0 0.0
    %263 = vmatprep.subr.mxu0 0.0
    %264 = vmatpush2.msra.mxu0 0.0
    %265 = vmatprep.subr.mxu0 0.0
    %266 = vmatpush2.msra.mxu0 0.0
    %267 = vmatprep.subr.mxu0 0.0
    %268 = vmatpush2.msra.mxu0 0.0
    %269 = vmatprep.subr.mxu0 0.0
    %270 = vmatpush2.msra.mxu0 0.0
    %271 = vmatprep.subr.mxu0 0.0
    %272 = vmatpush2.msra.mxu0 0.0
    %273 = vmatprep.subr.mxu0 0.0
    %274 = vmatpush2.msra.mxu0 0.0
    %275 = vmatprep.mubr.f32.mxu0 0.0
    %276 = vmatmul.mubr.f32.gmra.mxu0 %v200
    %v277 = vpop.f32.mrf.mxu0
    %v278 = vadd.f32 0.0, %v277
    %v279 = vpop.f32.mrf.mxu0
    %v280 = vadd.f32 0.0, %v279
    %281 = vmatprep.mubr.f32.mxu0 0.0
    %282 = vmatmul.mubr.f32.gmra.mxu0 %v203
    %v283 = vpop.f32.mrf.mxu0
    %v284 = vadd.f32 0.0, %v283
    %v285 = vpop.f32.mrf.mxu0
    %v286 = vadd.f32 0.0, %v285
    %287 = vmatprep.mubr.f32.mxu0 0.0
    %288 = vmatmul.mubr.f32.gmra.mxu0 %v206
    %v289 = vpop.f32.mrf.mxu0
    %v290 = vadd.f32 0.0, %v289
    %v291 = vpop.f32.mrf.mxu0
    %v292 = vadd.f32 0.0, %v291
    %293 = vmatprep.mubr.f32.mxu0 0.0
    %294 = vmatmul.mubr.f32.gmra.mxu0 %v209
    %v295 = vpop.f32.mrf.mxu0
    %v296 = vadd.f32 0.0, %v295
    %v297 = vpop.f32.mrf.mxu0
    %v298 = vadd.f32 0.0, %v297
    %299 = vdwg.mxu0
    %300 = vmatprep.subr.mxu0 0.0
    %301 = vmatpush1.msra.mxu0 0.0
    %302 = vmatprep.subr.mxu0 0.0
    %303 = vmatpush1.msra.mxu0 0.0
    %304 = vmatprep.subr.mxu0 0.0
    %305 = vmatpush1.msra.mxu0 0.0
    %306 = vmatprep.subr.mxu0 0.0
    %307 = vmatpush1.msra.mxu0 0.0
    %308 = vmatprep.subr.mxu0 0.0
    %309 = vmatpush1.msra.mxu0 0.0
    %310 = vmatprep.subr.mxu0 0.0
    %311 = vmatpush1.msra.mxu0 0.0
    %312 = vmatprep.subr.mxu0 0.0
    %313 = vmatpush1.msra.mxu0 0.0
    %314 = vmatprep.subr.mxu0 0.0
    %315 = vmatpush1.msra.mxu0 0.0
    %316 = vmatprep.subr.mxu0 0.0
    %317 = vmatpush1.msra.mxu0 0.0
    %318 = vmatprep.subr.mxu0 0.0
    %319 = vmatpush1.msra.mxu0 0.0
    %320 = vmatprep.subr.mxu0 0.0
    %321 = vmatpush1.msra.mxu0 0.0
    %322 = vmatprep.subr.mxu0 0.0
    %323 = vmatpush1.msra.mxu0 0.0
    %324 = vmatprep.subr.mxu0 0.0
    %325 = vmatpush1.msra.mxu0 0.0
    %326 = vmatprep.subr.mxu0 0.0
    %327 = vmatpush1.msra.mxu0 0.0
    %328 = vmatprep.subr.mxu0 %v193
    %329 = vmatpush1.msra.mxu0 %v192
    %330 = vmatprep.subr.mxu0 %v189
    %331 = vmatpush1.msra.mxu0 %v188
    %332 = vmatprep.subr.mxu0 0.0
    %333 = vmatpush2.msra.mxu0 0.0
    %334 = vmatprep.subr.mxu0 0.0
    %335 = vmatpush2.msra.mxu0 0.0
    %336 = vmatprep.subr.mxu0 0.0
    %337 = vmatpush2.msra.mxu0 0.0
    %338 = vmatprep.subr.mxu0 0.0
    %339 = vmatpush2.msra.mxu0 0.0
    %340 = vmatprep.subr.mxu0 0.0
    %341 = vmatpush2.msra.mxu0 0.0
    %342 = vmatprep.subr.mxu0 0.0
    %343 = vmatpush2.msra.mxu0 0.0
    %344 = vmatprep.subr.mxu0 0.0
    %345 = vmatpush2.msra.mxu0 0.0
    %346 = vmatprep.subr.mxu0 0.0
    %347 = vmatpush2.msra.mxu0 0.0
    %348 = vmatprep.subr.mxu0 0.0
    %349 = vmatpush2.msra.mxu0 0.0
    %350 = vmatprep.subr.mxu0 0.0
    %351 = vmatpush2.msra.mxu0 0.0
    %352 = vmatprep.subr.mxu0 0.0
    %353 = vmatpush2.msra.mxu0 0.0
    %354 = vmatprep.subr.mxu0 0.0
    %355 = vmatpush2.msra.mxu0 0.0
    %356 = vmatprep.subr.mxu0 0.0
    %357 = vmatpush2.msra.mxu0 0.0
    %358 = vmatprep.subr.mxu0 0.0
    %359 = vmatpush2.msra.mxu0 0.0
    %360 = vmatprep.subr.mxu0 0.0
    %361 = vmatpush2.msra.mxu0 0.0
    %362 = vmatprep.subr.mxu0 0.0
    %363 = vmatpush2.msra.mxu0 0.0
    %364 = vmatprep.mubr.f32.mxu0 0.0
    %365 = vmatmul.mubr.f32.gmra.mxu0 %v200
    %v366 = vpop.f32.mrf.mxu0
    %v367 = vadd.f32 0.0, %v366
    %v368 = vpop.f32.mrf.mxu0
    %v369 = vadd.f32 0.0, %v368
    %370 = vmatprep.mubr.f32.mxu0 0.0
    %371 = vmatmul.mubr.f32.gmra.mxu0 %v203
    %v372 = vpop.f32.mrf.mxu0
    %v373 = vadd.f32 0.0, %v372
    %v374 = vpop.f32.mrf.mxu0
    %v375 = vadd.f32 0.0, %v374
    %376 = vmatprep.mubr.f32.mxu0 0.0
    %377 = vmatmul.mubr.f32.gmra.mxu0 %v206
    %v378 = vpop.f32.mrf.mxu0
    %v379 = vadd.f32 0.0, %v378
    %v380 = vpop.f32.mrf.mxu0
    %v381 = vadd.f32 0.0, %v380
    %382 = vmatprep.mubr.f32.mxu0 0.0
    %383 = vmatmul.mubr.f32.gmra.mxu0 %v209
    %v384 = vpop.f32.mrf.mxu0
    %v385 = vadd.f32 0.0, %v384
    %v386 = vpop.f32.mrf.mxu0
    %v387 = vadd.f32 0.0, %v386
    %388 = vdwg.mxu0
    %v389 = vadd.f32 %v278, %v284
    %v390 = vadd.f32 %v280, %v286
    %v391 = vadd.f32 %v389, %v290
    %v392 = vadd.f32 %v390, %v292
    %v393 = vadd.f32 %v391, %v296
    %v394 = vadd.f32 %v392, %v298
    %v395 = vmul.f32 %v278, %v278
    %v396 = vmul.f32 %v280, %v280
    %v397 = vmul.f32 %v284, %v284
    %v398 = vmul.f32 %v286, %v286
    %v399 = vadd.f32 %v395, %v397
    %v400 = vadd.f32 %v396, %v398
    %v401 = vmul.f32 %v290, %v290
    %v402 = vmul.f32 %v292, %v292
    %v403 = vadd.f32 %v399, %v401
    %v404 = vadd.f32 %v400, %v402
    %v405 = vmul.f32 %v296, %v296
    %v406 = vmul.f32 %v298, %v298
    %v407 = vadd.f32 %v403, %v405
    %v408 = vadd.f32 %v404, %v406
    %v409 = vadd.f32 %v393, %v394
    %410 = vadd.xlane.f32.xlu0 %v409
    %v411 = vpop.xlane.xlu0 %410
    %v412 = vadd.f32 %v407, %v408
    %413 = vadd.xlane.f32.xlu0 %v412
    %v414 = vpop.xlane.xlu0 %413
    %v415 = vmul.f32 %v411, 0.0009765625
    %v416 = vmul.f32 %v414, 0.0009765625
    %v417 = vmul.f32 %v415, %v415
    %v418 = vsub.f32 %v416, %v417
    %v419 = vmax.f32 %v418, 0.0
    %v420 = vadd.f32 %v419, 1e-05
    %v421 = vrsqrt.pop %v420
    %v422 = vmul.f32 %v415, %v421
    %v423 = vmul.f32 %v278, %v421
    %v424 = vmul.f32 %v280, %v421
    %v425 = vsub.f32 %v423, %v422
    %v426 = vsub.f32 %v424, %v422
    %v427 = vmax.f32 %v425, 0.0
    %v428 = vmax.f32 %v426, 0.0
    %429 = vst [vmem:[#allocation2] sm:$0xff] %v427
    %430 = vst [vmem:[#allocation2 + $0x8] sm:$0xff] %v428
    %v431 = vmul.f32 %v284, %v421
    %v432 = vmul.f32 %v286, %v421
    %v433 = vsub.f32 %v431, %v422
    %v434 = vsub.f32 %v432, %v422
    %v435 = vmax.f32 %v433, 0.0
    %v436 = vmax.f32 %v434, 0.0
    %437 = vst [vmem:[#allocation2 + $0x10] sm:$0xff] %v435
    %438 = vst [vmem:[#allocation2 + $0x18] sm:$0xff] %v436
    %v439 = vmul.f32 %v290, %v421
    %v440 = vmul.f32 %v292, %v421
    %v441 = vsub.f32 %v439, %v422
    %v442 = vsub.f32 %v440, %v422
    %v443 = vmax.f32 %v441, 0.0
    %v444 = vmax.f32 %v442, 0.0
    %445 = vst [vmem:[#allocation2 + $0x20] sm:$0xff] %v443
    %446 = vst [vmem:[#allocation2 + $0x28] sm:$0xff] %v444
    %v447 = vmul.f32 %v296, %v421
    %v448 = vmul.f32 %v298, %v421
    %v449 = vsub.f32 %v447, %v422
    %v450 = vsub.f32 %v448, %v422
    %v451 = vmax.f32 %v449, 0.0
    %v452 = vmax.f32 %v450, 0.0
    %453 = vst [vmem:[#allocation2 + $0x30] sm:$0xff] %v451
    %454 = vst [vmem:[#allocation2 + $0x38] sm:$0xff] %v452
    %v455 = vadd.f32 %v367, %v373
    %v456 = vadd.f32 %v369, %v375
    %v457 = vadd.f32 %v455, %v379
    %v458 = vadd.f32 %v456, %v381
    %v459 = vadd.f32 %v457, %v385
    %v460 = vadd.f32 %v458, %v387
    %v461 = vmul.f32 %v367, %v367
    %v462 = vmul.f32 %v369, %v369
    %v463 = vmul.f32 %v373, %v373
    %v464 = vmul.f32 %v375, %v375
    %v465 = vadd.f32 %v461, %v463
    %v466 = vadd.f32 %v462, %v464
    %v467 = vmul.f32 %v379, %v379
    %v468 = vmul.f32 %v381, %v381
    %v469 = vadd.f32 %v465, %v467
    %v470 = vadd.f32 %v466, %v468
    %v471 = vmul.f32 %v385, %v385
    %v472 = vmul.f32 %v387, %v387
    %v473 = vadd.f32 %v469, %v471
    %v474 = vadd.f32 %v470, %v472
    %v475 = vadd.f32 %v459, %v460
    %476 = vadd.xlane.f32.xlu0 %v475
    %v477 = vpop.xlane.xlu0 %476
    %v478 = vadd.f32 %v473, %v474
    %479 = vadd.xlane.f32.xlu0 %v478
    %v480 = vpop.xlane.xlu0 %479
    %v481 = vmul.f32 %v477, 0.0009765625
    %v482 = vmul.f32 %v480, 0.0009765625
    %v483 = vmul.f32 %v481, %v481
    %v484 = vsub.f32 %v482, %v483
    %v485 = vmax.f32 %v484, 0.0
    %v486 = vadd.f32 %v485, 1e-05
    %v487 = vrsqrt.pop %v486
    %v488 = vmul.f32 %v481, %v487
    %v489 = vmul.f32 %v367, %v487
    %v490 = vmul.f32 %v369, %v487
    %v491 = vsub.f32 %v489, %v488
    %v492 = vsub.f32 %v490, %v488
    %v493 = vmax.f32 %v491, 0.0
    %v494 = vmax.f32 %v492, 0.0
    %s495 = scalar_lea.vmem [#allocation2], 64
    %496 = vst [vmem:[%s495] sm:$0xff] %v493
    %497 = vst [vmem:[%s495 + $0x8] sm:$0xff] %v494
    %v498 = vmul.f32 %v373, %v487
    %v499 = vmul.f32 %v375, %v487
    %v500 = vsub.f32 %v498, %v488
    %v501 = vsub.f32 %v499, %v488
    %v502 = vmax.f32 %v500, 0.0
    %v503 = vmax.f32 %v501, 0.0
    %504 = vst [vmem:[%s495 + $0x10] sm:$0xff] %v502
    %505 = vst [vmem:[%s495 + $0x18] sm:$0xff] %v503
    %v506 = vmul.f32 %v379, %v487
    %v507 = vmul.f32 %v381, %v487
    %v508 = vsub.f32 %v506, %v488
    %v509 = vsub.f32 %v507, %v488
    %v510 = vmax.f32 %v508, 0.0
    %v511 = vmax.f32 %v509, 0.0
    %512 = vst [vmem:[%s495 + $0x20] sm:$0xff] %v510
    %513 = vst [vmem:[%s495 + $0x28] sm:$0xff] %v511
    %v514 = vmul.f32 %v385, %v487
    %v515 = vmul.f32 %v387, %v487
    %v516 = vsub.f32 %v514, %v488
    %v517 = vsub.f32 %v515, %v488
    %v518 = vmax.f32 %v516, 0.0
    %v519 = vmax.f32 %v517, 0.0
    %520 = vst [vmem:[%s495 + $0x30] sm:$0xff] %v518
    %521 = vst [vmem:[%s495 + $0x38] sm:$0xff] %v519
    // Predicated region
    $region10: #{tpu_custom_call.1} parent=1 // pred_check
      _
    $region11: #{tpu_custom_call.1} parent=1 // pred_check_branch
      %523 = sbr.rel (0) target = $region13
    $region12: #{tpu_custom_call.1} parent=1 // pred_region
      %s525 = ssub.s32 2048, 2048
      %526 = vsyncadd [#allocation3], %s525
      %s527 = sshll.u32 [#allocation2], 4
      %s528 = int_to_ptr.vmem [resolvable:$true] %s527
      %533 = dma.vmem_to_hbm [thread:$0]  %s528, 2048, %s2, [#allocation3], 256, 256, 16
    $region13: #{tpu_custom_call.1} parent=1 // pred_fallthru
      _
    // Predicated region
    $region14: #{tpu_custom_call.1} parent=1 // pred_check
      _
    $region15: #{tpu_custom_call.1} parent=1 // pred_check_branch
      %535 = sbr.rel (0) target = $region17
    $region16: #{tpu_custom_call.1} parent=1 // pred_region
      %536 = dma.done [#allocation3], 2048
    $region17: #{tpu_custom_call.1} parent=1 // pred_fallthru
      _
    %537 = vsyncpa [#allocation3], 1

</llo_original>
